<compile_context>
chip_gen: v5e
topology: v5e:2x2
jax: 0.10.0
libtpu: 0.0.40
codegen_flags: <defaults>
</compile_context>

<pallas_src>
import random

import jax
import jax.numpy as jnp
from jax import lax
from jax.experimental import pallas as pl
from jax.experimental.pallas import tpu as pltpu


def _choose_block(rows: int, lanes: int, itemsize: int):
    """Pick a (row_tile, lane_tile) block for the flattened (rows, lanes) view."""
    # Sublane packing per dtype width (f32 -> 8, bf16 -> 16, int8/fp8 -> 32).
    sub = {4: 8, 2: 16, 1: 32}.get(itemsize, 8)

    # Lane tile: keep the full flattened H*W axis (lane-dense) unless it is
    # enormous; if we do tile it, the tile must be a multiple of 128.
    max_lane_tile = 16384
    if lanes <= max_lane_tile or lanes % 128 != 0:
        lane_tile = lanes
    else:
        lane_tile = max_lane_tile

    # Row tile: multiple of the sublane packing, sized so one block stays
    # around ~2 MiB (so in+out double buffering is <= ~8 MiB of VMEM).
    target_bytes = 2 * 1024 * 1024
    max_rows = max(sub, target_bytes // max(1, lane_tile * itemsize))
    if rows <= max_rows:
        row_tile = rows                       # full extent is always legal
    else:
        row_tile = min(512, (max_rows // sub) * sub)
        row_tile = max(sub, row_tile)
    return row_tile, lane_tile


def _make_waveblock_kernel(rh: int, w: int, lane_tile: int):
    """Kernel closed over static band height `rh`, image width `w`, lane tile."""

    def waveblock_kernel(sx_ref, x_ref, o_ref):
        # sx_ref: SMEM scalar-prefetch ref, int32[1] — band start row.
        # x_ref / o_ref: VMEM tiles of shape (row_tile, lane_tile) of the
        # flattened (N*C, H*W) view.
        sx = sx_ref[0]
        # The 1.0 band of rows [sx, sx+rh) is contiguous in the flattened
        # H*W axis: flat indices [sx*w, (sx+rh)*w).  Build a (1, lane_tile)
        # mask column and let the multiply broadcast it over rows.
        lane0 = pl.program_id(1) * lane_tile
        lanes = lax.broadcasted_iota(jnp.int32, (1, lane_tile), 1) + lane0
        lo = sx * w
        hi = lo + rh * w
        in_band = (lanes >= lo) & (lanes < hi)
        mask = jnp.where(in_band,
                         jnp.array(1.0, x_ref.dtype),
                         jnp.array(1.5, x_ref.dtype))
        o_ref[...] = x_ref[...] * mask

    return waveblock_kernel


def waveblock(x: jax.Array, sx: jax.Array, rh: int, training: bool = True):
    """Pallas implementation of Waveblock.forward.

    x:  (N, C, H, W) float array.
    sx: int32 scalar array — band start row (random, chosen by caller).
    rh: static Python int — band height = round(0.3 * H).
    """
    if not training:
        return x

    n, c, h, w = x.shape
    rows, lanes = n * c, h * w

    # Safety clamp (caller contract is 0 <= sx <= H - rh; clamp is free).
    sx_arr = jnp.clip(jnp.asarray(sx, jnp.int32), 0, max(h - rh, 0)).reshape((1,))

    # Lane-dense 2-D view: each row is one flattened (H, W) feature map.
    x2 = x.reshape(rows, lanes)

    row_tile, lane_tile = _choose_block(rows, lanes, x.dtype.itemsize)
    grid = (pl.cdiv(rows, row_tile), pl.cdiv(lanes, lane_tile))

    kernel = _make_waveblock_kernel(rh, w, lane_tile)

    grid_spec = pltpu.PrefetchScalarGridSpec(
        num_scalar_prefetch=1,
        grid=grid,
        in_specs=[
            pl.BlockSpec((row_tile, lane_tile), lambda i, j, sx_ref: (i, j)),
        ],
        out_specs=pl.BlockSpec((row_tile, lane_tile),
                               lambda i, j, sx_ref: (i, j)),
    )

    y2 = pl.pallas_call(
        kernel,
        out_shape=jax.ShapeDtypeStruct((rows, lanes), x.dtype),
        grid_spec=grid_spec,
        compiler_params=pltpu.CompilerParams(
            dimension_semantics=("parallel", "parallel")),
    )(sx_arr, x2)

    return y2.reshape(n, c, h, w)


def waveblock_reference(x, sx, rh):
    """Pure-JAX reference mirroring the PyTorch forward (training mode)."""
    h = x.shape[-2]
    r = jnp.arange(h)
    band = (r >= sx) & (r < sx + rh)
    mask = jnp.where(band, 1.0, 1.5).astype(x.dtype)[None, None, :, None]
    return x * mask


if __name__ == "__main__":
    # Deterministic inputs at small shapes (NCHW, like the PyTorch module).
    key = jax.random.PRNGKey(0)
    N, C, H, W = 2, 4, 16, 16
    x = jax.random.normal(key, (N, C, H, W), dtype=jnp.float32)

    # Waveblock has no learned parameters; the only state is the random band.
    # The PyTorch module uses Python `random`; choose it deterministically.
    rh = round(0.3 * H)                      # static band height
    random.seed(0)
    sx = random.randint(0, H - rh)           # deterministic band start

    y = waveblock(x, jnp.int32(sx), rh, training=True)
    y = jax.block_until_ready(y)

    # Correctness check vs pure-JAX reference of the PyTorch semantics.
    y_ref = waveblock_reference(x, sx, rh)
    assert jnp.allclose(y, y_ref, atol=1e-6), "mismatch vs reference"

    # Eval mode is identity.
    y_eval = waveblock(x, jnp.int32(sx), rh, training=False)
    assert jnp.array_equal(y_eval, x)

    print("KERNEL_OK")
</pallas_src>

<mosaic_0001>
module attributes {stable_mosaic.version = 11 : i64} {
  func.func @waveblock_kernel(%arg0: i32, %arg1: i32, %arg2: memref<1xi32, #tpu.memory_space<smem>>, %arg3: memref<8x256xf32, #tpu.memory_space<vmem>>, %arg4: memref<8x256xf32, #tpu.memory_space<vmem>>) attributes {dimension_semantics = [#tpu.dimension_semantics<parallel>, #tpu.dimension_semantics<parallel>], iteration_bounds = array<i64: 1, 1>, scalar_prefetch = 1 : i64, scratch_operands = 0 : i64, tpu.core_type = #tpu.core_type<tc>, window_params = [{transform_indices = @transform_0, window_bounds = array<i64: 8, 256>}, {transform_indices = @transform_1, window_bounds = array<i64: 8, 256>}]} {
    %c0 = arith.constant 0 : index
    %0 = memref.load %arg2[%c0] : memref<1xi32, #tpu.memory_space<smem>>
    %c256_i32 = arith.constant 256 : i32
    %1 = arith.muli %arg1, %c256_i32 : i32
    %2 = tpu.iota {dimensions = array<i32: 1>} : vector<1x256xi32>
    %3 = vector.broadcast %1 : i32 to vector<1x256xi32>
    %4 = arith.addi %2, %3 : vector<1x256xi32>
    %c16_i32 = arith.constant 16 : i32
    %5 = arith.muli %0, %c16_i32 : i32
    %c80_i32 = arith.constant 80 : i32
    %6 = arith.addi %5, %c80_i32 : i32
    %7 = vector.broadcast %5 : i32 to vector<1x256xi32>
    %8 = arith.cmpi sge, %4, %7 : vector<1x256xi32>
    %9 = vector.broadcast %6 : i32 to vector<1x256xi32>
    %10 = arith.cmpi slt, %4, %9 : vector<1x256xi32>
    %11 = arith.andi %8, %10 : vector<1x256xi1>
    %cst = arith.constant 1.000000e+00 : f32
    %cst_0 = arith.constant 1.500000e+00 : f32
    %12 = vector.broadcast %cst : f32 to vector<1x256xf32>
    %13 = vector.broadcast %cst_0 : f32 to vector<1x256xf32>
    %14 = arith.select %11, %12, %13 : vector<1x256xi1>, vector<1x256xf32>
    %c0_1 = arith.constant 0 : index
    %c0_2 = arith.constant 0 : index
    %15 = vector.load %arg3[%c0_1, %c0_2] : memref<8x256xf32, #tpu.memory_space<vmem>>, vector<8x256xf32>
    %16 = vector.broadcast %14 : vector<1x256xf32> to vector<8x256xf32>
    %17 = arith.mulf %15, %16 : vector<8x256xf32>
    %c0_3 = arith.constant 0 : index
    %c0_4 = arith.constant 0 : index
    %18 = vector.load %arg4[%c0_3, %c0_4] : memref<8x256xf32, #tpu.memory_space<vmem>>, vector<8x256xf32>
    tpu.vector_store %arg4[%c0_3, %c0_4], %17 {strides = array<i32>} : memref<8x256xf32, #tpu.memory_space<vmem>>, vector<8x256xf32>,
    return
  }
  func.func @transform_0(%arg0: i32, %arg1: i32, %arg2: memref<1xi32, #tpu.memory_space<smem>>) -> (i32, i32) {
    %c0_i32 = arith.constant 0 : i32
    return %arg0, %arg1 : i32, i32
  }
  func.func @transform_1(%arg0: i32, %arg1: i32, %arg2: memref<1xi32, #tpu.memory_space<smem>>) -> (i32, i32) {
    %c0_i32 = arith.constant 0 : i32
    return %arg0, %arg1 : i32, i32
  }
}

</mosaic_0001>

<llo_original>
// kernel: tpu_custom_call.1
$region0: #{tpu_custom_call.1}
  #allocation0 [shape = 'u32[]', space=smem, size = 0x4, offset = 0x4, fixed_abs, tag = 'smem constant byte address 0x4 - core index']
  #allocation1 [shape = 'u32[72,128]{1,0:T(1,128)}', space=vmem, size = 0x9000, scoped, tag = 'internal scratch']
  #allocation2 [shape = 's32[1]{0}', space=sflag, size = 0x4, scoped, tag = 'scoped memory for tpu_custom_call.1']
  #allocation3 [shape = 's32[1]{0:T(128)S(6)}', space=smem, size = 0x200, scoped, tag = 'prefetched SMEM operand 0']
  %s0 = inlined_call_operand.<no memory space> [shape: s32[1], index: 0, kind: input, shape index: {}]
  %s1 = inlined_call_operand.hbm [shape: f32[8,256], index: 1, kind: input, shape index: {}]
  %s2 = inlined_call_operand.hbm [shape: f32[8,256], index: 2, kind: output, shape index: {}]
  %s3 = sld [smem:[#allocation0]]
  $region18: #{tpu_custom_call.1} parent=0
    _
  %s5 = ssub.s32 1, %s3
  %s6 = scalar_select 0, %s5, %s3
  %7 = sst [smem:[#allocation3]] %s0
  $region1: #{tpu_custom_call.1} parent=0
    #allocation4 [shape = 'u8[8192]{0}', space=vmem, size = 0x2000, scoped, tag = 'input window, operand 1, single buffered']
    #allocation5 [shape = 's32[1]{0}', space=sflag, size = 0x4, scoped, tag = 'scoped memory for tpu_custom_call.1']
    #allocation6 [shape = 's32[1]{0}', space=sflag, size = 0x4, scoped, tag = 'scoped memory for tpu_custom_call.1']
    #allocation7 [shape = 'u8[8192]{0}', space=vmem, size = 0x2000, scoped, tag = 'output window, operand 0, single buffered']
    %8 = vsyncpa [#allocation5], 0
    %9 = vsyncpa [#allocation6], 0
    // Predicated region
    $region2: #{tpu_custom_call.1} parent=1 // pred_check
      _
    $region3: #{tpu_custom_call.1} parent=1 // pred_check_branch
      %11 = sbr.rel (0) target = $region5
    $region4: #{tpu_custom_call.1} parent=1 // pred_region
      %13 = vsyncadd [#allocation5], 0
      %s15 = sshll.u32 %s1, 4
      %s16 = int_to_ptr.hbm [resolvable:$true] %s15
      %s17 = sshll.u32 [#allocation4], 4
      %s18 = int_to_ptr.vmem [resolvable:$true] %s17
      %20 = dma.hbm_to_vmem [thread:$0]  %s16, 256, %s18, [#allocation5]
    $region5: #{tpu_custom_call.1} parent=1 // pred_fallthru
      _
    // Predicated region
    $region6: #{tpu_custom_call.1} parent=1 // pred_check
      _
    $region7: #{tpu_custom_call.1} parent=1 // pred_check_branch
      %22 = sbr.rel (0) target = $region9
    $region8: #{tpu_custom_call.1} parent=1 // pred_region
      %24 = dma.done [#allocation5], 256
    $region9: #{tpu_custom_call.1} parent=1 // pred_fallthru
      _
    %s25 = sld [smem:[#allocation3]]
    %s26 = smul.u32 0, 256
    %v27 = vlaneseq
    %v28 = vand.u32 %v27, 127
    %v29 = vadd.s32 %v28, 128
    %v30 = vstv %s26
    %v31 = vadd.s32 %v28, %v30
    %v32 = vadd.s32 %v29, %v30
    %s33 = smul.u32 %s25, 16
    %s34 = sadd.s32 %s33, 80
    %v35 = vstv %s33
    %vm36 = vcmp.ge.s32.totalorder %v31, %v35
    %vm37 = vcmp.ge.s32.totalorder %v32, %v35
    %v38 = vstv %s34
    %vm39 = vcmp.lt.s32.totalorder %v31, %v38
    %vm40 = vcmp.lt.s32.totalorder %v32, %v38
    %vm41 = vmand %vm36, %vm39
    %vm42 = vmand %vm37, %vm40
    %v43 = vsel %vm41, 1.0, 1.5
    %v44 = vsel %vm42, 1.0, 1.5
    %v45 = vld [vmem:[#allocation4] sm:$0xff]
    %v46 = vld [vmem:[#allocation4 + $0x8] sm:$0xff]
    %v47 = vmul.f32 %v45, %v43
    %v48 = vmul.f32 %v46, %v44
    %49 = vst [vmem:[#allocation7] sm:$0xff] %v47
    %50 = vst [vmem:[#allocation7 + $0x8] sm:$0xff] %v48
    // Predicated region
    $region10: #{tpu_custom_call.1} parent=1 // pred_check
      _
    $region11: #{tpu_custom_call.1} parent=1 // pred_check_branch
      %52 = sbr.rel (0) target = $region13
    $region12: #{tpu_custom_call.1} parent=1 // pred_region
      %54 = vsyncadd [#allocation6], 0
      %s56 = sshll.u32 [#allocation7], 4
      %s57 = int_to_ptr.vmem [resolvable:$true] %s56
      %s58 = sshll.u32 %s2, 4
      %s59 = int_to_ptr.hbm [resolvable:$true] %s58
      %61 = dma.vmem_to_hbm [thread:$0]  %s57, 256, %s59, [#allocation6]
    $region13: #{tpu_custom_call.1} parent=1 // pred_fallthru
      _
    // Predicated region
    $region14: #{tpu_custom_call.1} parent=1 // pred_check
      _
    $region15: #{tpu_custom_call.1} parent=1 // pred_check_branch
      %63 = sbr.rel (0) target = $region17
    $region16: #{tpu_custom_call.1} parent=1 // pred_region
      %65 = dma.done [#allocation6], 256
    $region17: #{tpu_custom_call.1} parent=1 // pred_fallthru
      _
    %66 = vsyncpa [#allocation5], 1
    %67 = vsyncpa [#allocation6], 1

</llo_original>
